<compile_context>
chip_gen: v5e
topology: v5e:2x2
jax: 0.10.0
libtpu: 0.0.40
codegen_flags: <defaults>
</compile_context>

<pallas_src>
import functools

import numpy as np
import jax
import jax.numpy as jnp
from jax.experimental import pallas as pl
from jax.experimental.pallas import tpu as pltpu


def _round_up(x, m):
    return (x + m - 1) // m * m


def _aggregate(m, z, num_nodes):
    """y = M @ z via unrolled VPU outer-product FMAs (columns u >= num_nodes of M are zero)."""
    acc = m[:, 0:1] * z[0:1, :]
    for u in range(1, num_nodes):
        acc = acc + m[:, u : u + 1] * z[u : u + 1, :]
    return acc


def _gcn_kernel(m_ref, x_ref, w1_ref, b1_ref, w2_ref, b2_ref, out_ref, *, num_nodes):
    m = m_ref[...]            # (N_PAD, N_PAD)
    x = x_ref[...]            # (N_PAD, F_IN_PAD)   -- batch dim squeezed by BlockSpec

    # Layer 1: dense transform on the MXU, graph aggregation on the VPU.
    xw1 = jnp.dot(x, w1_ref[...], preferred_element_type=jnp.float32)   # (N_PAD, HID_PAD)
    h1 = _aggregate(m, xw1, num_nodes) + b1_ref[...]
    h1 = jnp.maximum(h1, 0.0)  # F.relu

    # Layer 2.
    hw2 = jnp.dot(h1, w2_ref[...], preferred_element_type=jnp.float32)  # (N_PAD, C_PAD)
    h2 = _aggregate(m, hw2, num_nodes) + b2_ref[...]

    out_ref[...] = h2.astype(out_ref.dtype)  # full-lane (128-wide) store, no masking


def gcn_forward(m, x, w1, b1, w2, b2):
    """Run the 2-layer GCN. x may be (N, F_in) or batched (B, N, F_in)."""
    single = x.ndim == 2
    if single:
        x = x[None]
    bsz, n, f_in = x.shape
    hidden = w1.shape[1]
    num_classes = w2.shape[1]

    # Pad node dim to sublane multiple (8) and feature dims to lane multiple (128).
    n_pad = _round_up(n, 8)
    f_in_pad = _round_up(f_in, 128)
    hid_pad = _round_up(hidden, 128)
    c_pad = _round_up(num_classes, 128)

    f32 = jnp.float32
    m_p = jnp.zeros((n_pad, n_pad), f32).at[:n, :n].set(m.astype(f32))
    x_p = jnp.zeros((bsz, n_pad, f_in_pad), f32).at[:, :n, :f_in].set(x.astype(f32))
    w1_p = jnp.zeros((f_in_pad, hid_pad), f32).at[:f_in, :hidden].set(w1.astype(f32))
    b1_p = jnp.zeros((1, hid_pad), f32).at[:, :hidden].set(b1.astype(f32))
    w2_p = jnp.zeros((hid_pad, c_pad), f32).at[:hidden, :num_classes].set(w2.astype(f32))
    b2_p = jnp.zeros((1, c_pad), f32).at[:, :num_classes].set(b2.astype(f32))

    kernel = functools.partial(_gcn_kernel, num_nodes=n)

    out_p = pl.pallas_call(
        kernel,
        out_shape=jax.ShapeDtypeStruct((bsz, n_pad, c_pad), f32),
        grid=(bsz,),
        in_specs=[
            pl.BlockSpec((n_pad, n_pad), lambda b: (0, 0)),            # M   (shared)
            pl.BlockSpec((None, n_pad, f_in_pad), lambda b: (b, 0, 0)),  # X   (per-batch)
            pl.BlockSpec((f_in_pad, hid_pad), lambda b: (0, 0)),       # W1  (shared)
            pl.BlockSpec((1, hid_pad), lambda b: (0, 0)),              # b1  (shared)
            pl.BlockSpec((hid_pad, c_pad), lambda b: (0, 0)),          # W2  (shared)
            pl.BlockSpec((1, c_pad), lambda b: (0, 0)),                # b2  (shared)
        ],
        out_specs=pl.BlockSpec((None, n_pad, c_pad), lambda b: (b, 0, 0)),
        compiler_params=pltpu.CompilerParams(
            dimension_semantics=("parallel",),  # shard batch across v7x's 2 TCs; no-op on v5e/v6e
        ),
    )(m_p, x_p, w1_p, b1_p, w2_p, b2_p)

    out = out_p[:, :n, :num_classes]
    return out[0] if single else out


def build_norm_adj(src, dst, num_nodes):
    """Dense normalized adjacency M = D_in^{-1/2} A^T D_out^{-1/2} (degrees clamped to 1)."""
    a = np.zeros((num_nodes, num_nodes), dtype=np.float32)  # a[v, u] = 1 for edge u->v
    for u, v in zip(src, dst):
        a[v, u] += 1.0
    out_deg = np.clip(a.sum(axis=0), 1.0, None)  # out-degree of source nodes
    in_deg = np.clip(a.sum(axis=1), 1.0, None)   # in-degree of destination nodes
    m = (in_deg[:, None] ** -0.5) * a * (out_deg[None, :] ** -0.5)
    return jnp.asarray(m, dtype=jnp.float32)


def gcn_reference(m, x, w1, b1, w2, b2):
    h = jnp.maximum(m @ (x @ w1) + b1, 0.0)
    return m @ (h @ w2) + b2


if __name__ == "__main__":
    # Fixed graph from the module: g = dgl.graph(([0, 0, 1], [1, 2, 2])) -> 3 nodes.
    num_nodes = 3
    in_feats, hidden_size, num_classes = 16, 32, 8
    batch = 8  # batch of independent feature matrices to amortize launch overhead

    m = build_norm_adj([0, 0, 1], [1, 2, 2], num_nodes)

    key = jax.random.PRNGKey(0)
    k_x, k_w1, k_b1, k_w2, k_b2 = jax.random.split(key, 5)
    x = jax.random.normal(k_x, (batch, num_nodes, in_feats), dtype=jnp.float32)
    w1 = jax.random.normal(k_w1, (in_feats, hidden_size), dtype=jnp.float32) * 0.1
    b1 = jax.random.normal(k_b1, (1, hidden_size), dtype=jnp.float32) * 0.1
    w2 = jax.random.normal(k_w2, (hidden_size, num_classes), dtype=jnp.float32) * 0.1
    b2 = jax.random.normal(k_b2, (1, num_classes), dtype=jnp.float32) * 0.1

    # Batched forward (one pallas_call, grid over batch).
    out = gcn_forward(m, x, w1, b1, w2, b2)
    out = jax.block_until_ready(out)
    ref = jax.vmap(lambda xi: gcn_reference(m, xi, w1, b1, w2, b2))(x)
    assert out.shape == (batch, num_nodes, num_classes)
    assert jnp.allclose(out, ref, atol=1e-4, rtol=1e-4)

    # Single forward (the original module signature: one (N, F_in) feature matrix).
    out1 = gcn_forward(m, x[0], w1, b1, w2, b2)
    out1 = jax.block_until_ready(out1)
    assert out1.shape == (num_nodes, num_classes)
    assert jnp.allclose(out1, gcn_reference(m, x[0], w1, b1, w2, b2), atol=1e-4, rtol=1e-4)

    print("KERNEL_OK")
</pallas_src>

<mosaic_0001>
module attributes {stable_mosaic.version = 11 : i64} {
  func.func @_gcn_kernel(%arg0: i32, %arg1: memref<8x8xf32, #tpu.memory_space<vmem>>, %arg2: memref<1x8x128xf32, #tpu.memory_space<vmem>>, %arg3: memref<128x128xf32, #tpu.memory_space<vmem>>, %arg4: memref<1x128xf32, #tpu.memory_space<vmem>>, %arg5: memref<128x128xf32, #tpu.memory_space<vmem>>, %arg6: memref<1x128xf32, #tpu.memory_space<vmem>>, %arg7: memref<1x8x128xf32, #tpu.memory_space<vmem>>) attributes {dimension_semantics = [#tpu.dimension_semantics<parallel>], iteration_bounds = array<i64: 8>, scalar_prefetch = 0 : i64, scratch_operands = 0 : i64, tpu.core_type = #tpu.core_type<tc>, window_params = [{pipeline_mode = #tpu.pipeline_mode<synchronous>, transform_indices = @transform_0, window_bounds = array<i64: 8, 8>}, {transform_indices = @transform_1, window_bounds = array<i64: 1, 8, 128>}, {pipeline_mode = #tpu.pipeline_mode<synchronous>, transform_indices = @transform_2, window_bounds = array<i64: 128, 128>}, {pipeline_mode = #tpu.pipeline_mode<synchronous>, transform_indices = @transform_3, window_bounds = array<i64: 1, 128>}, {pipeline_mode = #tpu.pipeline_mode<synchronous>, transform_indices = @transform_4, window_bounds = array<i64: 128, 128>}, {pipeline_mode = #tpu.pipeline_mode<synchronous>, transform_indices = @transform_5, window_bounds = array<i64: 1, 128>}, {transform_indices = @transform_6, window_bounds = array<i64: 1, 8, 128>}]} {
    %c0 = arith.constant 0 : index
    %c0_0 = arith.constant 0 : index
    %0 = vector.load %arg1[%c0, %c0_0] : memref<8x8xf32, #tpu.memory_space<vmem>>, vector<8x8xf32>
    %c0_1 = arith.constant 0 : index
    %c0_2 = arith.constant 0 : index
    %c0_3 = arith.constant 0 : index
    %1 = vector.load %arg2[%c0_1, %c0_2, %c0_3] : memref<1x8x128xf32, #tpu.memory_space<vmem>>, vector<1x8x128xf32>
    %2 = vector.shape_cast %1 : vector<1x8x128xf32> to vector<8x128xf32>
    %c0_4 = arith.constant 0 : index
    %c0_5 = arith.constant 0 : index
    %3 = vector.load %arg3[%c0_4, %c0_5] : memref<128x128xf32, #tpu.memory_space<vmem>>, vector<128x128xf32>
    %cst = arith.constant dense<0.000000e+00> : vector<8x128xf32>
    %4 = tpu.matmul %2, %3, %cst {dimension_numbers = #tpu.dot_dimension_numbers<[1], [0], [0], [1], [0, 0, 1, 1], [], []>} : vector<8x128xf32>, vector<128x128xf32>, vector<8x128xf32> -> vector<8x128xf32>
    %5 = vector.extract_strided_slice %0 {offsets = [0, 0], sizes = [8, 1], strides = [1, 1]} : vector<8x8xf32> to vector<8x1xf32>
    %6 = vector.extract_strided_slice %4 {offsets = [0, 0], sizes = [1, 128], strides = [1, 1]} : vector<8x128xf32> to vector<1x128xf32>
    %7 = vector.broadcast %5 : vector<8x1xf32> to vector<8x128xf32>
    %8 = vector.broadcast %6 : vector<1x128xf32> to vector<8x128xf32>
    %9 = arith.mulf %7, %8 : vector<8x128xf32>
    %10 = vector.extract_strided_slice %0 {offsets = [0, 1], sizes = [8, 1], strides = [1, 1]} : vector<8x8xf32> to vector<8x1xf32>
    %11 = vector.extract_strided_slice %4 {offsets = [1, 0], sizes = [1, 128], strides = [1, 1]} : vector<8x128xf32> to vector<1x128xf32>
    %12 = vector.broadcast %10 : vector<8x1xf32> to vector<8x128xf32>
    %13 = vector.broadcast %11 : vector<1x128xf32> to vector<8x128xf32>
    %14 = arith.mulf %12, %13 : vector<8x128xf32>
    %15 = arith.addf %9, %14 : vector<8x128xf32>
    %16 = vector.extract_strided_slice %0 {offsets = [0, 2], sizes = [8, 1], strides = [1, 1]} : vector<8x8xf32> to vector<8x1xf32>
    %17 = vector.extract_strided_slice %4 {offsets = [2, 0], sizes = [1, 128], strides = [1, 1]} : vector<8x128xf32> to vector<1x128xf32>
    %18 = vector.broadcast %16 : vector<8x1xf32> to vector<8x128xf32>
    %19 = vector.broadcast %17 : vector<1x128xf32> to vector<8x128xf32>
    %20 = arith.mulf %18, %19 : vector<8x128xf32>
    %21 = arith.addf %15, %20 : vector<8x128xf32>
    %c0_6 = arith.constant 0 : index
    %c0_7 = arith.constant 0 : index
    %22 = vector.load %arg4[%c0_6, %c0_7] : memref<1x128xf32, #tpu.memory_space<vmem>>, vector<1x128xf32>
    %23 = vector.broadcast %22 : vector<1x128xf32> to vector<8x128xf32>
    %24 = arith.addf %21, %23 : vector<8x128xf32>
    %cst_8 = arith.constant 0.000000e+00 : f32
    %25 = vector.broadcast %cst_8 : f32 to vector<8x128xf32>
    %26 = arith.maximumf %24, %25 : vector<8x128xf32>
    %c0_9 = arith.constant 0 : index
    %c0_10 = arith.constant 0 : index
    %27 = vector.load %arg5[%c0_9, %c0_10] : memref<128x128xf32, #tpu.memory_space<vmem>>, vector<128x128xf32>
    %cst_11 = arith.constant dense<0.000000e+00> : vector<8x128xf32>
    %28 = tpu.matmul %26, %27, %cst_11 {dimension_numbers = #tpu.dot_dimension_numbers<[1], [0], [0], [1], [0, 0, 1, 1], [], []>} : vector<8x128xf32>, vector<128x128xf32>, vector<8x128xf32> -> vector<8x128xf32>
    %29 = vector.extract_strided_slice %0 {offsets = [0, 0], sizes = [8, 1], strides = [1, 1]} : vector<8x8xf32> to vector<8x1xf32>
    %30 = vector.extract_strided_slice %28 {offsets = [0, 0], sizes = [1, 128], strides = [1, 1]} : vector<8x128xf32> to vector<1x128xf32>
    %31 = vector.broadcast %29 : vector<8x1xf32> to vector<8x128xf32>
    %32 = vector.broadcast %30 : vector<1x128xf32> to vector<8x128xf32>
    %33 = arith.mulf %31, %32 : vector<8x128xf32>
    %34 = vector.extract_strided_slice %0 {offsets = [0, 1], sizes = [8, 1], strides = [1, 1]} : vector<8x8xf32> to vector<8x1xf32>
    %35 = vector.extract_strided_slice %28 {offsets = [1, 0], sizes = [1, 128], strides = [1, 1]} : vector<8x128xf32> to vector<1x128xf32>
    %36 = vector.broadcast %34 : vector<8x1xf32> to vector<8x128xf32>
    %37 = vector.broadcast %35 : vector<1x128xf32> to vector<8x128xf32>
    %38 = arith.mulf %36, %37 : vector<8x128xf32>
    %39 = arith.addf %33, %38 : vector<8x128xf32>
    %40 = vector.extract_strided_slice %0 {offsets = [0, 2], sizes = [8, 1], strides = [1, 1]} : vector<8x8xf32> to vector<8x1xf32>
    %41 = vector.extract_strided_slice %28 {offsets = [2, 0], sizes = [1, 128], strides = [1, 1]} : vector<8x128xf32> to vector<1x128xf32>
    %42 = vector.broadcast %40 : vector<8x1xf32> to vector<8x128xf32>
    %43 = vector.broadcast %41 : vector<1x128xf32> to vector<8x128xf32>
    %44 = arith.mulf %42, %43 : vector<8x128xf32>
    %45 = arith.addf %39, %44 : vector<8x128xf32>
    %c0_12 = arith.constant 0 : index
    %c0_13 = arith.constant 0 : index
    %46 = vector.load %arg6[%c0_12, %c0_13] : memref<1x128xf32, #tpu.memory_space<vmem>>, vector<1x128xf32>
    %47 = vector.broadcast %46 : vector<1x128xf32> to vector<8x128xf32>
    %48 = arith.addf %45, %47 : vector<8x128xf32>
    %c0_14 = arith.constant 0 : index
    %c0_15 = arith.constant 0 : index
    %c0_16 = arith.constant 0 : index
    %49 = vector.load %arg7[%c0_14, %c0_15, %c0_16] : memref<1x8x128xf32, #tpu.memory_space<vmem>>, vector<1x8x128xf32>
    %50 = vector.shape_cast %49 : vector<1x8x128xf32> to vector<8x128xf32>
    %51 = vector.shape_cast %48 : vector<8x128xf32> to vector<1x8x128xf32>
    tpu.vector_store %arg7[%c0_14, %c0_15, %c0_16], %51 {strides = array<i32>} : memref<1x8x128xf32, #tpu.memory_space<vmem>>, vector<1x8x128xf32>,
    return
  }
  func.func @transform_0(%arg0: i32) -> (i32, i32) {
    %c0_i32 = arith.constant 0 : i32
    %c0_i32_0 = arith.constant 0 : i32
    %c0_i32_1 = arith.constant 0 : i32
    return %c0_i32, %c0_i32_0 : i32, i32
  }
  func.func @transform_1(%arg0: i32) -> (i32, i32, i32) {
    %c0_i32 = arith.constant 0 : i32
    %c0_i32_0 = arith.constant 0 : i32
    %c0_i32_1 = arith.constant 0 : i32
    return %arg0, %c0_i32, %c0_i32_0 : i32, i32, i32
  }
  func.func @transform_2(%arg0: i32) -> (i32, i32) {
    %c0_i32 = arith.constant 0 : i32
    %c0_i32_0 = arith.constant 0 : i32
    %c0_i32_1 = arith.constant 0 : i32
    return %c0_i32, %c0_i32_0 : i32, i32
  }
  func.func @transform_3(%arg0: i32) -> (i32, i32) {
    %c0_i32 = arith.constant 0 : i32
    %c0_i32_0 = arith.constant 0 : i32
    %c0_i32_1 = arith.constant 0 : i32
    return %c0_i32, %c0_i32_0 : i32, i32
  }
  func.func @transform_4(%arg0: i32) -> (i32, i32) {
    %c0_i32 = arith.constant 0 : i32
    %c0_i32_0 = arith.constant 0 : i32
    %c0_i32_1 = arith.constant 0 : i32
    return %c0_i32, %c0_i32_0 : i32, i32
  }
  func.func @transform_5(%arg0: i32) -> (i32, i32) {
    %c0_i32 = arith.constant 0 : i32
    %c0_i32_0 = arith.constant 0 : i32
    %c0_i32_1 = arith.constant 0 : i32
    return %c0_i32, %c0_i32_0 : i32, i32
  }
  func.func @transform_6(%arg0: i32) -> (i32, i32, i32) {
    %c0_i32 = arith.constant 0 : i32
    %c0_i32_0 = arith.constant 0 : i32
    %c0_i32_1 = arith.constant 0 : i32
    return %arg0, %c0_i32, %c0_i32_0 : i32, i32, i32
  }
}

</mosaic_0001>

<llo_original>
// kernel: tpu_custom_call.1
$region0: #{tpu_custom_call.1}
  #allocation0 [shape = 'u32[]', space=smem, size = 0x4, offset = 0x4, fixed_abs, tag = 'smem constant byte address 0x4 - core index']
  #allocation1 [shape = 'u32[72,128]{1,0:T(1,128)}', space=vmem, size = 0x9000, scoped, tag = 'internal scratch']
  %s0 = inlined_call_operand.hbm [shape: f32[8,8], index: 0, kind: input, shape index: {}]
  %s1 = inlined_call_operand.hbm [shape: f32[8,8,128], index: 1, kind: input, shape index: {}]
  %s2 = inlined_call_operand.hbm [shape: f32[128,128], index: 2, kind: input, shape index: {}]
  %s3 = inlined_call_operand.vmem [shape: f32[1,128], index: 3, kind: input, shape index: {}]
  %s4 = inlined_call_operand.hbm [shape: f32[128,128], index: 4, kind: input, shape index: {}]
  %s5 = inlined_call_operand.vmem [shape: f32[1,128], index: 5, kind: input, shape index: {}]
  %s6 = inlined_call_operand.hbm [shape: f32[8,8,128], index: 6, kind: output, shape index: {}]
  %s7 = sld [smem:[#allocation0]]
  $region73: #{tpu_custom_call.1} parent=0
    _
  %s9 = ssub.s32 1, %s7
  %s10 = scalar_select 0, %s9, %s7
  $region1: #{tpu_custom_call.1} parent=0
    #allocation2 [shape = 'u8[4096]{0}', space=vmem, size = 0x1000, scoped, tag = 'input window, operand 0, single buffered']
    #allocation3 [shape = 's32[2]{0}', space=sflag, size = 0x8, scoped, tag = 'scoped memory for tpu_custom_call.1']
    #allocation4 [shape = 's32[2]{0}', space=sflag, size = 0x8, scoped, tag = 'scoped memory for tpu_custom_call.1']
    #allocation5 [shape = 'u8[8192]{0}', space=vmem, size = 0x2000, scoped, tag = 'input window, operand 1']
    #allocation6 [shape = 's32[2]{0}', space=sflag, size = 0x8, scoped, tag = 'scoped memory for tpu_custom_call.1']
    #allocation7 [shape = 'u8[65536]{0}', space=vmem, size = 0x10000, scoped, tag = 'input window, operand 2, single buffered']
    #allocation8 [shape = 'u8[65536]{0}', space=vmem, size = 0x10000, scoped, tag = 'input window, operand 4, single buffered']
    #allocation9 [shape = 's32[1]{0}', space=sflag, size = 0x4, scoped, tag = 'scoped memory for tpu_custom_call.1']
    #allocation10 [shape = 'u8[8192]{0}', space=vmem, size = 0x2000, scoped, tag = 'output window, operand 0']
    %11 = vsyncpa [#allocation3], 0
    %12 = vsyncpa [#allocation6], 0
    %s13 = scalar_lea.sflag [#allocation6], 1
    %14 = vsyncpa %s13, 0
    %15 = vsyncpa [#allocation9], 0
    %16 = vsyncpa [#allocation4], 0
    %s17 = scalar_lea.sflag [#allocation4], 1
    %18 = vsyncpa %s17, 0
    loop: start=0, step=1, limit=10
    $region2: #{tpu_custom_call.1} parent=1 // loop_pre_header
      _
    $region3: #{tpu_custom_call.1} parent=1 // loop_header
      %s20 = sphi 0, %s24
      %p21 = scmp.ge.s32.totalorder %s20, 10
      %s28 = sphi 0, %s28
      %s30 = sphi 0, %s28
      %s31 = sphi 0, %s30
      %s45 = sphi 0, %s31
      %s51 = sphi 0, %s53
      %s54 = sphi 0, %s51
      %s55 = sphi 0, %s54
      %s71 = sphi 0, %s55
      %s75 = sphi 0, %s75
      %s77 = sphi 0, %s75
      %s78 = sphi 0, %s77
      %s92 = sphi 0, %s78
      %s96 = sphi 0, %s96
      %s98 = sphi 0, %s96
      %s99 = sphi 0, %s98
      %s113 = sphi 0, %s99
      %s117 = sphi 0, %s117
      %s119 = sphi 0, %s117
      %s120 = sphi 0, %s119
      %s134 = sphi 0, %s120
      %s138 = sphi 0, %s138
      %s140 = sphi 0, %s138
      %s141 = sphi 0, %s140
      %s155 = sphi 0, %s141
      %s161 = sphi 0, %s163
      %s164 = sphi 0, %s161
      %s165 = sphi 0, %s164
      %s181 = sphi 0, %s165
    $region4: #{tpu_custom_call.1} parent=1 // loop_header_branch
      %23 = sbr.rel (%p21) target = $region8
    $region5: #{tpu_custom_call.1} parent=1 // loop_body
      %s25 = ssub.s32 %s20, 1
      %s26 = ssub.s32 %s20, 2
      %s27 = sadd.s32 %s20, 1
      %s29 = sadd.s32 %s28, 1
      %p32 = scmp.eq.s32.totalorder %s20, 7
      %p33 = scmp.ne.s32.totalorder %s28, %s30
      %p34 = scmp.eq.s32.totalorder %s20, 0
      %p35 = por %p33, %p34
      %p36 = scmp.ne.s32.totalorder %s28, %s30
      %p37 = scmp.eq.s32.totalorder %s25, 7
      %p38 = por %p36, %p37
      %p39 = scmp.ne.s32.totalorder %s30, %s31
      %p40 = scmp.eq.s32.totalorder %s25, 0
      %p41 = por %p39, %p40
      %p42 = scmp.ne.s32.totalorder %s30, %s31
      %p43 = scmp.eq.s32.totalorder %s26, 7
      %p44 = por %p42, %p43
      %p46 = scmp.ne.s32.totalorder %s31, %s45
      %p47 = scmp.eq.s32.totalorder %s26, 0
      %p48 = por %p46, %p47
      %s49 = ssub.s32 %s20, %s27
      %p50 = scmp.eq.s32.totalorder %s49, 0
      %s52 = sadd.s32 %s51, 1
      %s53 = scalar_select %p50, %s51, %s52
      %p56 = pneg %p50
      %p57 = scmp.eq.s32.totalorder %s20, 7
      %p58 = por %p56, %p57
      %p59 = scmp.ne.s32.totalorder %s51, %s54
      %p60 = scmp.eq.s32.totalorder %s20, 0
      %p61 = por %p59, %p60
      %p62 = scmp.ne.s32.totalorder %s51, %s54
      %p63 = scmp.eq.s32.totalorder %s25, 7
      %p64 = por %p62, %p63
      %p65 = scmp.ne.s32.totalorder %s54, %s55
      %p66 = scmp.eq.s32.totalorder %s25, 0
      %p67 = por %p65, %p66
      %p68 = scmp.ne.s32.totalorder %s54, %s55
      %p69 = scmp.eq.s32.totalorder %s26, 7
      %p70 = por %p68, %p69
      %p72 = scmp.ne.s32.totalorder %s55, %s71
      %p73 = scmp.eq.s32.totalorder %s26, 0
      %p74 = por %p72, %p73
      %s76 = sadd.s32 %s75, 1
      %p79 = scmp.eq.s32.totalorder %s20, 7
      %p80 = scmp.ne.s32.totalorder %s75, %s77
      %p81 = scmp.eq.s32.totalorder %s20, 0
      %p82 = por %p80, %p81
      %p83 = scmp.ne.s32.totalorder %s75, %s77
      %p84 = scmp.eq.s32.totalorder %s25, 7
      %p85 = por %p83, %p84
      %p86 = scmp.ne.s32.totalorder %s77, %s78
      %p87 = scmp.eq.s32.totalorder %s25, 0
      %p88 = por %p86, %p87
      %p89 = scmp.ne.s32.totalorder %s77, %s78
      %p90 = scmp.eq.s32.totalorder %s26, 7
      %p91 = por %p89, %p90
      %p93 = scmp.ne.s32.totalorder %s78, %s92
      %p94 = scmp.eq.s32.totalorder %s26, 0
      %p95 = por %p93, %p94
      %s97 = sadd.s32 %s96, 1
      %p100 = scmp.eq.s32.totalorder %s20, 7
      %p101 = scmp.ne.s32.totalorder %s96, %s98
      %p102 = scmp.eq.s32.totalorder %s20, 0
      %p103 = por %p101, %p102
      %p104 = scmp.ne.s32.totalorder %s96, %s98
      %p105 = scmp.eq.s32.totalorder %s25, 7
      %p106 = por %p104, %p105
      %p107 = scmp.ne.s32.totalorder %s98, %s99
      %p108 = scmp.eq.s32.totalorder %s25, 0
      %p109 = por %p107, %p108
      %p110 = scmp.ne.s32.totalorder %s98, %s99
      %p111 = scmp.eq.s32.totalorder %s26, 7
      %p112 = por %p110, %p111
      %p114 = scmp.ne.s32.totalorder %s99, %s113
      %p115 = scmp.eq.s32.totalorder %s26, 0
      %p116 = por %p114, %p115
      %s118 = sadd.s32 %s117, 1
      %p121 = scmp.eq.s32.totalorder %s20, 7
      %p122 = scmp.ne.s32.totalorder %s117, %s119
      %p123 = scmp.eq.s32.totalorder %s20, 0
      %p124 = por %p122, %p123
      %p125 = scmp.ne.s32.totalorder %s117, %s119
      %p126 = scmp.eq.s32.totalorder %s25, 7
      %p127 = por %p125, %p126
      %p128 = scmp.ne.s32.totalorder %s119, %s120
      %p129 = scmp.eq.s32.totalorder %s25, 0
      %p130 = por %p128, %p129
      %p131 = scmp.ne.s32.totalorder %s119, %s120
      %p132 = scmp.eq.s32.totalorder %s26, 7
      %p133 = por %p131, %p132
      %p135 = scmp.ne.s32.totalorder %s120, %s134
      %p136 = scmp.eq.s32.totalorder %s26, 0
      %p137 = por %p135, %p136
      %s139 = sadd.s32 %s138, 1
      %p142 = scmp.eq.s32.totalorder %s20, 7
      %p143 = scmp.ne.s32.totalorder %s138, %s140
      %p144 = scmp.eq.s32.totalorder %s20, 0
      %p145 = por %p143, %p144
      %p146 = scmp.ne.s32.totalorder %s138, %s140
      %p147 = scmp.eq.s32.totalorder %s25, 7
      %p148 = por %p146, %p147
      %p149 = scmp.ne.s32.totalorder %s140, %s141
      %p150 = scmp.eq.s32.totalorder %s25, 0
      %p151 = por %p149, %p150
      %p152 = scmp.ne.s32.totalorder %s140, %s141
      %p153 = scmp.eq.s32.totalorder %s26, 7
      %p154 = por %p152, %p153
      %p156 = scmp.ne.s32.totalorder %s141, %s155
      %p157 = scmp.eq.s32.totalorder %s26, 0
      %p158 = por %p156, %p157
      %s159 = ssub.s32 %s20, %s27
      %p160 = scmp.eq.s32.totalorder %s159, 0
      %s162 = sadd.s32 %s161, 1
      %s163 = scalar_select %p160, %s161, %s162
      %p166 = pneg %p160
      %p167 = scmp.eq.s32.totalorder %s20, 7
      %p168 = por %p166, %p167
      %p169 = scmp.ne.s32.totalorder %s161, %s164
      %p170 = scmp.eq.s32.totalorder %s20, 0
      %p171 = por %p169, %p170
      %p172 = scmp.ne.s32.totalorder %s161, %s164
      %p173 = scmp.eq.s32.totalorder %s25, 7
      %p174 = por %p172, %p173
      %p175 = scmp.ne.s32.totalorder %s164, %s165
      %p176 = scmp.eq.s32.totalorder %s25, 0
      %p177 = por %p175, %p176
      %p178 = scmp.ne.s32.totalorder %s164, %s165
      %p179 = scmp.eq.s32.totalorder %s26, 7
      %p180 = por %p178, %p179
      %p182 = scmp.ne.s32.totalorder %s165, %s181
      %p183 = scmp.eq.s32.totalorder %s26, 0
      %p184 = por %p182, %p183
      %p185 = scmp.le.s32.totalorder 1, %s20
      %p186 = scmp.lt.s32.totalorder %s20, 9
      %p187 = pnand %p185, %p186
      %p188 = pneg %p187
      // Predicated region
      $region9: #{tpu_custom_call.1} parent=5 // pred_check
        _
      $region10: #{tpu_custom_call.1} parent=5 // pred_check_branch
        %190 = sbr.rel (%p187) target = $region12
      $region11: #{tpu_custom_call.1} parent=5 // pred_region
        %s191 = ssub.s32 %s20, 1
        // Predicated region
        $region13: #{tpu_custom_call.1} parent=11 // pred_check
          %p192 = pneg %p41
        $region14: #{tpu_custom_call.1} parent=11 // pred_check_branch
          %194 = sbr.rel (%p192) target = $region16
        $region15: #{tpu_custom_call.1} parent=11 // pred_region
          %196 = vsyncadd [#allocation3], 0
          %s198 = sshll.u32 %s0, 4
          %s199 = int_to_ptr.hbm [resolvable:$true] %s198
          %s200 = sshll.u32 [#allocation2], 4
          %s201 = int_to_ptr.vmem [resolvable:$true] %s200
          %203 = dma.hbm_to_vmem [thread:$0]  %s199, 128, %s201, [#allocation3]
        $region16: #{tpu_custom_call.1} parent=11 // pred_fallthru
          _
        // Predicated region
        $region17: #{tpu_custom_call.1} parent=11 // pred_check
          %p204 = pneg %p88
        $region18: #{tpu_custom_call.1} parent=11 // pred_check_branch
          %206 = sbr.rel (%p204) target = $region20
        $region19: #{tpu_custom_call.1} parent=11 // pred_region
          %208 = vsyncadd [#allocation6], 0
          %s209 = sshll.u32 %s2, 4
          %s210 = int_to_ptr.hbm [resolvable:$true] %s209
          %s211 = sshll.u32 [#allocation7], 4
          %s212 = int_to_ptr.vmem [resolvable:$true] %s211
          %217 = dma.hbm_to_vmem [thread:$0]  %s210, 2048, %s212, [#allocation6], 128, 128, 8
        $region20: #{tpu_custom_call.1} parent=11 // pred_fallthru
          _
        // Predicated region
        $region21: #{tpu_custom_call.1} parent=11 // pred_check
          %p218 = pneg %p109
        $region22: #{tpu_custom_call.1} parent=11 // pred_check_branch
          %220 = sbr.rel (%p218) target = $region24
        $region23: #{tpu_custom_call.1} parent=11 // pred_region
          _
        $region24: #{tpu_custom_call.1} parent=11 // pred_fallthru
          _
        // Predicated region
        $region25: #{tpu_custom_call.1} parent=11 // pred_check
          %p221 = pneg %p130
        $region26: #{tpu_custom_call.1} parent=11 // pred_check_branch
          %223 = sbr.rel (%p221) target = $region28
        $region27: #{tpu_custom_call.1} parent=11 // pred_region
          %225 = vsyncadd [#allocation9], 0
          %s226 = sshll.u32 %s4, 4
          %s227 = int_to_ptr.hbm [resolvable:$true] %s226
          %s228 = sshll.u32 [#allocation8], 4
          %s229 = int_to_ptr.vmem [resolvable:$true] %s228
          %234 = dma.hbm_to_vmem [thread:$0]  %s227, 2048, %s229, [#allocation9], 128, 128, 8
        $region28: #{tpu_custom_call.1} parent=11 // pred_fallthru
          _
        // Predicated region
        $region29: #{tpu_custom_call.1} parent=11 // pred_check
          %p235 = pneg %p151
        $region30: #{tpu_custom_call.1} parent=11 // pred_check_branch
          %237 = sbr.rel (%p235) target = $region32
        $region31: #{tpu_custom_call.1} parent=11 // pred_region
          _
        $region32: #{tpu_custom_call.1} parent=11 // pred_fallthru
          _
      $region12: #{tpu_custom_call.1} parent=5 // pred_fallthru
        _
      %p238 = scmp.lt.s32.totalorder %s20, 8
      // Predicated region
      $region33: #{tpu_custom_call.1} parent=5 // pred_check
        %p239 = pneg %p238
      $region34: #{tpu_custom_call.1} parent=5 // pred_check_branch
        %241 = sbr.rel (%p239) target = $region36
      $region35: #{tpu_custom_call.1} parent=5 // pred_region
        // Predicated region
        $region37: #{tpu_custom_call.1} parent=35 // pred_check
          %p242 = pneg %p61
        $region38: #{tpu_custom_call.1} parent=35 // pred_check_branch
          %244 = sbr.rel (%p242) target = $region40
        $region39: #{tpu_custom_call.1} parent=35 // pred_region
          %s245 = sand.u32 %s20, 1
          %s246 = scalar_lea.sflag [#allocation6], %s245
          %s247 = sand.u32 %s51, 1
          %s248 = smul.addr %s247, 8
          %s249 = scalar_lea.vmem [#allocation5], %s248
          %251 = vsyncadd %s246, 0
          %s252 = smul.addr %s20, 8
          %s253 = scalar_lea.hbm %s1, %s252
          %s255 = sshll.u32 %s253, 4
          %s256 = int_to_ptr.hbm [resolvable:$true] %s255
          %s257 = sshll.u32 %s249, 4
          %s258 = int_to_ptr.vmem [resolvable:$true] %s257
          %260 = dma.hbm_to_vmem [thread:$0]  %s256, 128, %s258, %s246
        $region40: #{tpu_custom_call.1} parent=35 // pred_fallthru
          _
      $region36: #{tpu_custom_call.1} parent=5 // pred_fallthru
        _
      %p261 = scmp.le.s32.totalorder 1, %s20
      %p262 = scmp.lt.s32.totalorder %s20, 9
      %p263 = pnand %p261, %p262
      %p264 = pneg %p263
      // Predicated region
      $region41: #{tpu_custom_call.1} parent=5 // pred_check
        _
      $region42: #{tpu_custom_call.1} parent=5 // pred_check_branch
        %266 = sbr.rel (%p263) target = $region44
      $region43: #{tpu_custom_call.1} parent=5 // pred_region
        %s267 = ssub.s32 %s20, 1
        // Predicated region
        $region45: #{tpu_custom_call.1} parent=43 // pred_check
          %p268 = pneg %p41
        $region46: #{tpu_custom_call.1} parent=43 // pred_check_branch
          %270 = sbr.rel (%p268) target = $region48
        $region47: #{tpu_custom_call.1} parent=43 // pred_region
          %272 = dma.done [#allocation3], 128
        $region48: #{tpu_custom_call.1} parent=43 // pred_fallthru
          _
        %s273 = sand.u32 %s25, 1
        %s274 = scalar_lea.sflag [#allocation6], %s273
        %s275 = sand.u32 %s54, 1
        %s276 = smul.addr %s275, 8
        %s277 = scalar_lea.vmem [#allocation5], %s276
        // Predicated region
        $region49: #{tpu_custom_call.1} parent=43 // pred_check
          %p278 = pneg %p67
        $region50: #{tpu_custom_call.1} parent=43 // pred_check_branch
          %280 = sbr.rel (%p278) target = $region52
        $region51: #{tpu_custom_call.1} parent=43 // pred_region
          %282 = dma.done %s274, 128
        $region52: #{tpu_custom_call.1} parent=43 // pred_fallthru
          _
        // Predicated region
        $region53: #{tpu_custom_call.1} parent=43 // pred_check
          %p283 = pneg %p88
        $region54: #{tpu_custom_call.1} parent=43 // pred_check_branch
          %285 = sbr.rel (%p283) target = $region56
        $region55: #{tpu_custom_call.1} parent=43 // pred_region
          %287 = dma.done [#allocation6], 2048
        $region56: #{tpu_custom_call.1} parent=43 // pred_fallthru
          _
        // Predicated region
        $region57: #{tpu_custom_call.1} parent=43 // pred_check
          %p288 = pneg %p130
        $region58: #{tpu_custom_call.1} parent=43 // pred_check_branch
          %290 = sbr.rel (%p288) target = $region60
        $region59: #{tpu_custom_call.1} parent=43 // pred_region
          %292 = dma.done [#allocation9], 2048
        $region60: #{tpu_custom_call.1} parent=43 // pred_fallthru
          _
        %p293 = pneg %p41
        %p294 = pneg %p38
        %s295 = sand.u32 %s25, 1
        %s296 = scalar_lea.sflag [#allocation6], %s295
        %s297 = sand.u32 %s54, 1
        %s298 = smul.addr %s297, 8
        %s299 = scalar_lea.vmem [#allocation5], %s298
        %p300 = pneg %p67
        %p301 = pneg %p64
        %p302 = pneg %p88
        %p303 = pneg %p85
        %p304 = pneg %p109
        %p305 = pneg %p106
        %p306 = pneg %p130
        %p307 = pneg %p127
        %p308 = pneg %p151
        %p309 = pneg %p148
        %p310 = pneg %p177
        %p311 = pneg %p174
        %s312 = sand.u32 %s164, 1
        %s313 = scalar_lea.sflag [#allocation4], %s312
        %s314 = sand.u32 %s164, 1
        %s315 = smul.addr %s314, 8
        %s316 = scalar_lea.vmem [#allocation10], %s315
        %v317 = vld [vmem:[#allocation2] sm:$0xff]
        %v318 = vld [vmem:[%s277] sm:$0xff]
        %v319 = vld [vmem:[#allocation7] sm:$0xff]
        %v320 = vld [vmem:[#allocation7 + $0x8] sm:$0xff]
        %v321 = vld [vmem:[#allocation7 + $0x10] sm:$0xff]
        %v322 = vld [vmem:[#allocation7 + $0x18] sm:$0xff]
        %v323 = vld [vmem:[#allocation7 + $0x20] sm:$0xff]
        %v324 = vld [vmem:[#allocation7 + $0x28] sm:$0xff]
        %v325 = vld [vmem:[#allocation7 + $0x30] sm:$0xff]
        %v326 = vld [vmem:[#allocation7 + $0x38] sm:$0xff]
        %v327 = vld [vmem:[#allocation7 + $0x40] sm:$0xff]
        %v328 = vld [vmem:[#allocation7 + $0x48] sm:$0xff]
        %v329 = vld [vmem:[#allocation7 + $0x50] sm:$0xff]
        %v330 = vld [vmem:[#allocation7 + $0x58] sm:$0xff]
        %v331 = vld [vmem:[#allocation7 + $0x60] sm:$0xff]
        %v332 = vld [vmem:[#allocation7 + $0x68] sm:$0xff]
        %v333 = vld [vmem:[#allocation7 + $0x70] sm:$0xff]
        %v334 = vld [vmem:[#allocation7 + $0x78] sm:$0xff]
        %335 = vmatpush.msra.mxu0 %v334
        %336 = vmatpush.msra.mxu0 %v333
        %337 = vmatpush.msra.mxu0 %v332
        %338 = vmatpush.msra.mxu0 %v331
        %339 = vmatpush.msra.mxu0 %v330
        %340 = vmatpush.msra.mxu0 %v329
        %341 = vmatpush.msra.mxu0 %v328
        %342 = vmatpush.msra.mxu0 %v327
        %343 = vmatpush.msra.mxu0 %v326
        %344 = vmatpush.msra.mxu0 %v325
        %345 = vmatpush.msra.mxu0 %v324
        %346 = vmatpush.msra.mxu0 %v323
        %347 = vmatpush.msra.mxu0 %v322
        %348 = vmatpush.msra.mxu0 %v321
        %349 = vmatpush.msra.mxu0 %v320
        %350 = vmatpush.msra.mxu0 %v319
        %351 = vmatmul.f32.gmra.mxu0 %v318
        %v352 = vpop.f32.mrf.mxu0
        %v353 = vadd.f32 0.0, %v352
        %354 = vdwg.mxu0
        %356 = vset.pattern.permute.xlu0 0
        %357 = vperm.xlu0 %356, %v317
        %v358 = vpop.permute.xlu0 %357
        %v360 = vperm.slane %v353, 0
        %v361 = vmul.f32 %v358, %v360
        %362 = vset.pattern.permute.xlu0 1
        %363 = vperm.xlu0 %362, %v317
        %v364 = vpop.permute.xlu0 %363
        %v366 = vperm.slane %v353, 1
        %v367 = vmul.f32 %v364, %v366
        %v368 = vadd.f32 %v361, %v367
        %369 = vset.pattern.permute.xlu0 2
        %370 = vperm.xlu0 %369, %v317
        %v371 = vpop.permute.xlu0 %370
        %v373 = vperm.slane %v353, 2
        %v374 = vmul.f32 %v371, %v373
        %v375 = vadd.f32 %v368, %v374
        %v376 = vld [vmem:[%s3] sm:$0x1]
        %v378 = vperm.slane %v376, 0
        %v380 = vadd.f32 %v375, %v378
        %v381 = vmax.f32 %v380, 0.0
        %v382 = vld [vmem:[#allocation8] sm:$0xff]
        %v383 = vld [vmem:[#allocation8 + $0x8] sm:$0xff]
        %v384 = vld [vmem:[#allocation8 + $0x10] sm:$0xff]
        %v385 = vld [vmem:[#allocation8 + $0x18] sm:$0xff]
        %v386 = vld [vmem:[#allocation8 + $0x20] sm:$0xff]
        %v387 = vld [vmem:[#allocation8 + $0x28] sm:$0xff]
        %v388 = vld [vmem:[#allocation8 + $0x30] sm:$0xff]
        %v389 = vld [vmem:[#allocation8 + $0x38] sm:$0xff]
        %v390 = vld [vmem:[#allocation8 + $0x40] sm:$0xff]
        %v391 = vld [vmem:[#allocation8 + $0x48] sm:$0xff]
        %v392 = vld [vmem:[#allocation8 + $0x50] sm:$0xff]
        %v393 = vld [vmem:[#allocation8 + $0x58] sm:$0xff]
        %v394 = vld [vmem:[#allocation8 + $0x60] sm:$0xff]
        %v395 = vld [vmem:[#allocation8 + $0x68] sm:$0xff]
        %v396 = vld [vmem:[#allocation8 + $0x70] sm:$0xff]
        %v397 = vld [vmem:[#allocation8 + $0x78] sm:$0xff]
        %398 = vmatpush.msra.mxu0 %v397
        %399 = vmatpush.msra.mxu0 %v396
        %400 = vmatpush.msra.mxu0 %v395
        %401 = vmatpush.msra.mxu0 %v394
        %402 = vmatpush.msra.mxu0 %v393
        %403 = vmatpush.msra.mxu0 %v392
        %404 = vmatpush.msra.mxu0 %v391
        %405 = vmatpush.msra.mxu0 %v390
        %406 = vmatpush.msra.mxu0 %v389
        %407 = vmatpush.msra.mxu0 %v388
        %408 = vmatpush.msra.mxu0 %v387
        %409 = vmatpush.msra.mxu0 %v386
        %410 = vmatpush.msra.mxu0 %v385
        %411 = vmatpush.msra.mxu0 %v384
        %412 = vmatpush.msra.mxu0 %v383
        %413 = vmatpush.msra.mxu0 %v382
        %414 = vmatmul.f32.gmra.mxu0 %v381
        %v415 = vpop.f32.mrf.mxu0
        %v416 = vadd.f32 0.0, %v415
        %417 = vdwg.mxu0
        %v418 = vperm.slane %v416, 0
        %v419 = vmul.f32 %v358, %v418
        %v420 = vperm.slane %v416, 1
        %v421 = vmul.f32 %v364, %v420
        %v422 = vadd.f32 %v419, %v421
        %v423 = vperm.slane %v416, 2
        %v424 = vmul.f32 %v371, %v423
        %v425 = vadd.f32 %v422, %v424
        %v426 = vld [vmem:[%s5] sm:$0x1]
        %v428 = vperm.slane %v426, 0
        %v430 = vadd.f32 %v425, %v428
        %431 = vst [vmem:[%s316] sm:$0xff] %v430
        %s432 = sand.u32 %s164, 1
        %s433 = scalar_lea.sflag [#allocation4], %s432
        %s434 = sand.u32 %s164, 1
        %s435 = smul.addr %s434, 8
        %s436 = scalar_lea.vmem [#allocation10], %s435
        // Predicated region
        $region61: #{tpu_custom_call.1} parent=43 // pred_check
          %p437 = pneg %p174
        $region62: #{tpu_custom_call.1} parent=43 // pred_check_branch
          %439 = sbr.rel (%p437) target = $region64
        $region63: #{tpu_custom_call.1} parent=43 // pred_region
          %441 = vsyncadd %s433, 0
          %s442 = smul.addr %s25, 8
          %s443 = scalar_lea.hbm %s6, %s442
          %s445 = sshll.u32 %s436, 4
          %s446 = int_to_ptr.vmem [resolvable:$true] %s445
          %s447 = sshll.u32 %s443, 4
          %s448 = int_to_ptr.hbm [resolvable:$true] %s447
          %450 = dma.vmem_to_hbm [thread:$0]  %s446, 128, %s448, %s433
        $region64: #{tpu_custom_call.1} parent=43 // pred_fallthru
          _
      $region44: #{tpu_custom_call.1} parent=5 // pred_fallthru
        _
      %p451 = scmp.le.s32.totalorder 2, %s20
      // Predicated region
      $region65: #{tpu_custom_call.1} parent=5 // pred_check
        %p452 = pneg %p451
      $region66: #{tpu_custom_call.1} parent=5 // pred_check_branch
        %454 = sbr.rel (%p452) target = $region68
      $region67: #{tpu_custom_call.1} parent=5 // pred_region
        %s455 = ssub.s32 %s20, 2
        // Predicated region
        $region69: #{tpu_custom_call.1} parent=67 // pred_check
          %p456 = pneg %p180
        $region70: #{tpu_custom_call.1} parent=67 // pred_check_branch
          %458 = sbr.rel (%p456) target = $region72
        $region71: #{tpu_custom_call.1} parent=67 // pred_region
          %s459 = sand.u32 %s165, 1
          %s460 = scalar_lea.sflag [#allocation4], %s459
          %s461 = sand.u32 %s165, 1
          %s462 = smul.addr %s461, 8
          %s463 = scalar_lea.vmem [#allocation10], %s462
          %465 = dma.done %s460, 128
        $region72: #{tpu_custom_call.1} parent=67 // pred_fallthru
          _
      $region68: #{tpu_custom_call.1} parent=5 // pred_fallthru
        _
    $region6: #{tpu_custom_call.1} parent=1 // loop_footer
      %s24 = sadd.s32 1, %s20
    $region7: #{tpu_custom_call.1} parent=1 // loop_footer_branch
      %19 = sbr.rel target = $region3
    $region8: #{tpu_custom_call.1} parent=1 // loop_exit
      _
    %466 = vsyncpa [#allocation3], 1
    %s467 = scalar_lea.sflag [#allocation3], 1
    %468 = vsyncpa %s467, 1
    %469 = vsyncpa [#allocation6], 1
    %s470 = scalar_lea.sflag [#allocation6], 1
    %471 = vsyncpa %s470, 1
    %472 = vsyncpa [#allocation9], 1
    %473 = vsyncpa [#allocation4], 1
    %s474 = scalar_lea.sflag [#allocation4], 1
    %475 = vsyncpa %s474, 1

</llo_original>
